<compile_context>
chip_gen: v7x
topology: tpu7x:2x2x1
jax: 0.10.0
libtpu: 0.0.40
codegen_flags: <defaults>
</compile_context>

<pallas_src>
import jax
import jax.numpy as jnp
from jax.experimental import pallas as pl
from jax.experimental.pallas import tpu as pltpu


def _combination_kernel(f1_ref, f2_ref, w1_ref, w2_ref, out_ref):
    """Elementwise combination on lane-packed tiles.

    f1_ref, f2_ref, out_ref : (TB, L) lane-dense feature tiles
    w1_ref                  : (4, L) rows = [w1_a, w1_b, w1_c, w1_d] (pre-tiled)
    w2_ref                  : (2, L) rows = [w2_a, w2_b]             (pre-tiled)
    """
    f1 = f1_ref[...]
    f2 = f2_ref[...]

    # Static leading-axis (sublane) slices only — no lane-axis slicing.
    w1a = w1_ref[0:1, :]
    w1b = w1_ref[1:2, :]
    w1c = w1_ref[2:3, :]
    w1d = w1_ref[3:4, :]
    w2a = w2_ref[0:1, :]
    w2b = w2_ref[1:2, :]

    feat_a = jnp.maximum(f1 * w1a + f2 * w1c, 0.0)   # relu3
    feat_b = jnp.maximum(f1 * w1b + f2 * w1d, 0.0)   # relu3
    out_ref[...] = feat_a * w2a + feat_b * w2b


_TINY_BYTES = 2 << 20          # grid-free single-invocation below this
_TILE_BUDGET_BYTES = 4 << 20   # target bytes per feature tile (gridded path)


def _round_up(x: int, m: int) -> int:
    return ((x + m - 1) // m) * m


def combination_korn_learn(feature1, label1, feature2, label2, weight1, weight2):
    """Pallas wrapper. label1/label2 are unused (as in the PyTorch forward)."""
    del label1, label2
    B, D = feature1.shape
    assert weight1.shape == (1, 4 * D) and weight2.shape == (1, 2 * D)
    dtype = feature1.dtype
    itemsize = jnp.dtype(dtype).itemsize
    # Sublane alignment for row tiles (8 for f32, 16 for bf16, ...).
    row_align = 8 * max(1, 4 // itemsize)

    # --- wrapper-side layout plumbing (free / XLA-fused) ---------------------
    # Split weights into D-wide chunks along a leading (sublane) axis.
    w1_rows = weight1.reshape(4, D).astype(dtype)     # rows: [a, b, c, d]
    w2_rows = weight2.reshape(2, D).astype(dtype)     # rows: [a, b]

    # Lane-dense packing: fold p batch rows into one 128-wide lane row.  If B
    # is not a multiple of p, pad by < p rows (tiny) instead of giving up on
    # lane density (masked stores would waste up to 128/D of the lane width).
    if D <= 128 and 128 % D == 0:
        p = 128 // D
    else:
        # TODO(synk): D not a multiple/divisor of 128 keeps a partially masked
        # lane remainder; acceptable fallback for uncommon feature dims.
        p = 1

    if p > 1 and B % p != 0:
        pad_rows = (-B) % p
        f1 = jnp.pad(feature1, ((0, pad_rows), (0, 0)))
        f2 = jnp.pad(feature2, ((0, pad_rows), (0, 0)))
        b_pack = B + pad_rows
    else:
        f1, f2 = feature1, feature2
        b_pack = B

    Bp, L = b_pack // p, p * D
    f1p = f1.reshape(Bp, L)          # contiguous reshape: no HBM copy
    f2p = f2.reshape(Bp, L)
    if p > 1:
        w1_rows = jnp.tile(w1_rows, (1, p))           # (4, L)
        w2_rows = jnp.tile(w2_rows, (1, p))           # (2, L)

    total_bytes = 3 * Bp * L * itemsize + 6 * L * itemsize

    if total_bytes <= _TINY_BYTES or Bp <= row_align:
        # Tiny problem: whole arrays live in VMEM, no grid-loop machinery.
        vmem = pltpu.MemorySpace.VMEM
        out_p = pl.pallas_call(
            _combination_kernel,
            out_shape=jax.ShapeDtypeStruct((Bp, L), dtype),
            in_specs=[pl.BlockSpec(memory_space=vmem)] * 4,
            out_specs=pl.BlockSpec(memory_space=vmem),
        )(f1p, f2p, w1_rows, w2_rows)
    else:
        # Gridded path: 1-D parallel grid over packed batch rows.
        bytes_per_row = L * itemsize
        budget_rows = max(
            row_align,
            ((_TILE_BUDGET_BYTES // bytes_per_row) // row_align) * row_align)

        # At least 2 grid steps so dimension_semantics=("parallel",) can shard
        # across v7x's two TensorCores; balance tiles across the steps.
        n_tiles = max(2, pl.cdiv(Bp, budget_rows))
        TB = min(budget_rows, _round_up(pl.cdiv(Bp, n_tiles), row_align))
        n_tiles = pl.cdiv(Bp, TB)
        # No padding to a TB multiple: Pallas masks the ragged last block
        # (OOB reads are garbage but the corresponding OOB writes are dropped,
        # which is exactly right for an elementwise kernel).

        # Double-buffered footprint: 3 feature tiles + the (tiny) weights.
        footprint = 2 * (3 * TB * L + 6 * L) * itemsize
        vmem_limit = footprint + (8 << 20)   # headroom; fits every generation

        out_p = pl.pallas_call(
            _combination_kernel,
            out_shape=jax.ShapeDtypeStruct((Bp, L), dtype),
            grid=(n_tiles,),
            in_specs=[
                pl.BlockSpec((TB, L), lambda i: (i, 0)),
                pl.BlockSpec((TB, L), lambda i: (i, 0)),
                pl.BlockSpec((4, L), lambda i: (0, 0)),   # weights resident
                pl.BlockSpec((2, L), lambda i: (0, 0)),   # weights resident
            ],
            out_specs=pl.BlockSpec((TB, L), lambda i: (i, 0)),
            compiler_params=pltpu.CompilerParams(
                dimension_semantics=("parallel",),
                vmem_limit_bytes=int(vmem_limit)),
        )(f1p, f2p, w1_rows, w2_rows)

    out = out_p.reshape(b_pack, D)
    if b_pack != B:
        out = out[:B]
    return out


def _reference(feature1, feature2, weight1, weight2):
    D = feature1.shape[-1]
    f_a = jnp.maximum(
        feature1 * weight1[:, :D] + feature2 * weight1[:, 2 * D:3 * D], 0.0)
    f_b = jnp.maximum(
        feature1 * weight1[:, D:2 * D] + feature2 * weight1[:, 3 * D:4 * D], 0.0)
    return f_a * weight2[:, :D] + f_b * weight2[:, D:2 * D]


if __name__ == "__main__":
    features_dim = 32
    num_classes = 10   # labels are ignored by forward; kept for call parity
    batch = 4

    key = jax.random.PRNGKey(0)
    k1, k2, k3, k4, kw1, kw2, k5, k6, k7, k8 = jax.random.split(key, 10)

    feature1 = jax.random.normal(k1, (batch, features_dim), dtype=jnp.float32)
    feature2 = jax.random.normal(k2, (batch, features_dim), dtype=jnp.float32)
    label1 = jax.random.normal(k3, (batch, num_classes), dtype=jnp.float32)  # unused
    label2 = jax.random.normal(k4, (batch, num_classes), dtype=jnp.float32)  # unused

    # Random weights keep the relu nontrivial (module inits to ones).
    weight1 = jax.random.normal(kw1, (1, 4 * features_dim), dtype=jnp.float32)
    weight2 = jax.random.normal(kw2, (1, 2 * features_dim), dtype=jnp.float32)

    # 1) Small shape (tiny / grid-free path).
    out = combination_korn_learn(feature1, label1, feature2, label2,
                                 weight1, weight2)
    out = jax.block_until_ready(out)
    ref = _reference(feature1, feature2, weight1, weight2)
    assert out.shape == (batch, features_dim)
    assert jnp.allclose(out, ref, atol=1e-5, rtol=1e-5), "small-shape mismatch"

    # 2) Awkward batch not divisible by the packing factor (pad-to-p path).
    odd_batch = 1003
    of1 = jax.random.normal(k5, (odd_batch, features_dim), dtype=jnp.float32)
    of2 = jax.random.normal(k6, (odd_batch, features_dim), dtype=jnp.float32)
    odd_out = combination_korn_learn(of1, None, of2, None, weight1, weight2)
    odd_out = jax.block_until_ready(odd_out)
    odd_ref = _reference(of1, of2, weight1, weight2)
    assert odd_out.shape == (odd_batch, features_dim)
    assert jnp.allclose(odd_out, odd_ref, atol=1e-5, rtol=1e-5), "odd-shape mismatch"

    # 3) Large batch (gridded path with a ragged last block, no host pad).
    big_batch = 50000
    bf1 = jax.random.normal(k7, (big_batch, features_dim), dtype=jnp.float32)
    bf2 = jax.random.normal(k8, (big_batch, features_dim), dtype=jnp.float32)
    big_out = combination_korn_learn(bf1, None, bf2, None, weight1, weight2)
    big_out = jax.block_until_ready(big_out)
    big_ref = _reference(bf1, bf2, weight1, weight2)
    assert big_out.shape == (big_batch, features_dim)
    assert jnp.allclose(big_out, big_ref, atol=1e-5, rtol=1e-5), "big-shape mismatch"

    print("KERNEL_OK")
</pallas_src>

<mosaic_0001>
module attributes {stable_mosaic.version = 11 : i64} {
  func.func @_combination_kernel(%arg0: memref<1x128xf32, #tpu.memory_space<vmem>>, %arg1: memref<1x128xf32, #tpu.memory_space<vmem>>, %arg2: memref<4x128xf32, #tpu.memory_space<vmem>>, %arg3: memref<2x128xf32, #tpu.memory_space<vmem>>, %arg4: memref<1x128xf32, #tpu.memory_space<vmem>>) attributes {dimension_semantics = [], scalar_prefetch = 0 : i64, scratch_operands = 0 : i64, tpu.core_type = #tpu.core_type<tc>} {
    %c0 = arith.constant 0 : index
    %c0_0 = arith.constant 0 : index
    %0 = vector.load %arg0[%c0, %c0_0] : memref<1x128xf32, #tpu.memory_space<vmem>>, vector<1x128xf32>
    %c0_1 = arith.constant 0 : index
    %c0_2 = arith.constant 0 : index
    %1 = vector.load %arg1[%c0_1, %c0_2] : memref<1x128xf32, #tpu.memory_space<vmem>>, vector<1x128xf32>
    %c0_3 = arith.constant 0 : index
    %c0_4 = arith.constant 0 : index
    %2 = vector.load %arg2[%c0_3, %c0_4] : memref<4x128xf32, #tpu.memory_space<vmem>>, vector<1x128xf32>
    %c1 = arith.constant 1 : index
    %c0_5 = arith.constant 0 : index
    %3 = vector.load %arg2[%c1, %c0_5] : memref<4x128xf32, #tpu.memory_space<vmem>>, vector<1x128xf32>
    %c2 = arith.constant 2 : index
    %c0_6 = arith.constant 0 : index
    %4 = vector.load %arg2[%c2, %c0_6] : memref<4x128xf32, #tpu.memory_space<vmem>>, vector<1x128xf32>
    %c3 = arith.constant 3 : index
    %c0_7 = arith.constant 0 : index
    %5 = vector.load %arg2[%c3, %c0_7] : memref<4x128xf32, #tpu.memory_space<vmem>>, vector<1x128xf32>
    %c0_8 = arith.constant 0 : index
    %c0_9 = arith.constant 0 : index
    %6 = vector.load %arg3[%c0_8, %c0_9] : memref<2x128xf32, #tpu.memory_space<vmem>>, vector<1x128xf32>
    %c1_10 = arith.constant 1 : index
    %c0_11 = arith.constant 0 : index
    %7 = vector.load %arg3[%c1_10, %c0_11] : memref<2x128xf32, #tpu.memory_space<vmem>>, vector<1x128xf32>
    %8 = arith.mulf %0, %2 : vector<1x128xf32>
    %9 = arith.mulf %1, %4 : vector<1x128xf32>
    %10 = arith.addf %8, %9 : vector<1x128xf32>
    %cst = arith.constant 0.000000e+00 : f32
    %11 = vector.broadcast %cst : f32 to vector<1x128xf32>
    %12 = arith.maximumf %10, %11 : vector<1x128xf32>
    %13 = arith.mulf %0, %3 : vector<1x128xf32>
    %14 = arith.mulf %1, %5 : vector<1x128xf32>
    %15 = arith.addf %13, %14 : vector<1x128xf32>
    %cst_12 = arith.constant 0.000000e+00 : f32
    %16 = vector.broadcast %cst_12 : f32 to vector<1x128xf32>
    %17 = arith.maximumf %15, %16 : vector<1x128xf32>
    %18 = arith.mulf %12, %6 : vector<1x128xf32>
    %19 = arith.mulf %17, %7 : vector<1x128xf32>
    %20 = arith.addf %18, %19 : vector<1x128xf32>
    %c0_13 = arith.constant 0 : index
    %c0_14 = arith.constant 0 : index
    %21 = vector.load %arg4[%c0_13, %c0_14] : memref<1x128xf32, #tpu.memory_space<vmem>>, vector<1x128xf32>
    tpu.vector_store %arg4[%c0_13, %c0_14], %20 {strides = array<i32>} : memref<1x128xf32, #tpu.memory_space<vmem>>, vector<1x128xf32>,
    return
  }
}

</mosaic_0001>

<llo_original>
// kernel: tpu_custom_call.1
$region0: #{tpu_custom_call.1}
  #allocation0 [shape = 'u32[]', space=smem, size = 0x4, offset = 0x4, fixed_abs, tag = 'smem constant byte address 0x4 - core index']
  #allocation1 [shape = 'u32[144,128]{1,0:T(1,128)}', space=vmem, size = 0x12000, scoped, tag = 'internal scratch']
  %s0 = inlined_call_operand.hbm [shape: f32[1,128], index: 0, kind: input, shape index: {}]
  %s1 = inlined_call_operand.vmem [shape: f32[1,128], index: 1, kind: input, shape index: {}]
  %s2 = inlined_call_operand.vmem [shape: f32[4,128], index: 2, kind: input, shape index: {}]
  %s3 = inlined_call_operand.vmem [shape: f32[2,128], index: 3, kind: input, shape index: {}]
  %s4 = inlined_call_operand.hbm [shape: f32[1,128], index: 4, kind: output, shape index: {}]
  %s5 = sld [smem:[#allocation0]]
  $region30: #{tpu_custom_call.1} parent=0
    _
  %s7 = ssub.s32 1, %s5
  %s8 = scalar_select 0, %s7, %s5
  $region1: #{tpu_custom_call.1} parent=0
    #allocation2 [shape = 'u8[512]{0}', space=vmem, size = 0x400, scoped, tag = 'input window, operand 0, single buffered']
    #allocation3 [shape = 's32[1]{0}', space=sflag, size = 0x4, scoped, tag = 'scoped memory for tpu_custom_call.1']
    #allocation4 [shape = 's32[1]{0}', space=sflag, size = 0x4, scoped, tag = 'scoped memory for tpu_custom_call.1']
    #allocation5 [shape = 'u8[512]{0}', space=vmem, size = 0x400, scoped, tag = 'output window, operand 0, single buffered']
    %9 = vsyncpa [#allocation3], 0
    %10 = vsyncpa [#allocation4], 0
    // Predicated region
    $region2: #{tpu_custom_call.1} parent=1 // pred_check
      _
    $region3: #{tpu_custom_call.1} parent=1 // pred_check_branch
      %12 = sbr.rel (0) target = $region5
    $region4: #{tpu_custom_call.1} parent=1 // pred_region
      %s14 = ssub.s32 16, 16
      %15 = vsyncadd [#allocation3], %s14
      %s17 = sshll.u32 [#allocation2], 4
      %s18 = int_to_ptr.vmem [resolvable:$true] %s17
      %20 = dma.hbm_to_vmem [thread:$0]  %s0, 16, %s18, [#allocation3]
    $region5: #{tpu_custom_call.1} parent=1 // pred_fallthru
      _
    // Predicated region
    $region6: #{tpu_custom_call.1} parent=1 // pred_check
      _
    $region7: #{tpu_custom_call.1} parent=1 // pred_check_branch
      %22 = sbr.rel (0) target = $region9
    $region8: #{tpu_custom_call.1} parent=1 // pred_region
      _
    $region9: #{tpu_custom_call.1} parent=1 // pred_fallthru
      _
    // Predicated region
    $region10: #{tpu_custom_call.1} parent=1 // pred_check
      _
    $region11: #{tpu_custom_call.1} parent=1 // pred_check_branch
      %24 = sbr.rel (0) target = $region13
    $region12: #{tpu_custom_call.1} parent=1 // pred_region
      _
    $region13: #{tpu_custom_call.1} parent=1 // pred_fallthru
      _
    // Predicated region
    $region14: #{tpu_custom_call.1} parent=1 // pred_check
      _
    $region15: #{tpu_custom_call.1} parent=1 // pred_check_branch
      %26 = sbr.rel (0) target = $region17
    $region16: #{tpu_custom_call.1} parent=1 // pred_region
      _
    $region17: #{tpu_custom_call.1} parent=1 // pred_fallthru
      _
    // Predicated region
    $region18: #{tpu_custom_call.1} parent=1 // pred_check
      _
    $region19: #{tpu_custom_call.1} parent=1 // pred_check_branch
      %28 = sbr.rel (0) target = $region21
    $region20: #{tpu_custom_call.1} parent=1 // pred_region
      %29 = dma.done [#allocation3], 16
    $region21: #{tpu_custom_call.1} parent=1 // pred_fallthru
      _
    %v30 = vld [vmem:[#allocation2] sm:$0x1]
    %v31 = vld [vmem:[%s1] sm:$0x1]
    %v32 = vld [vmem:[%s2] sm:$0x1]
    %v33 = vld [vmem:[%s2 + $0x1] sm:$0x1]
    %v34 = vld [vmem:[%s2 + $0x2] sm:$0x1]
    %v35 = vld [vmem:[%s2 + $0x3] sm:$0x1]
    %v36 = vld [vmem:[%s3] sm:$0x1]
    %v37 = vld [vmem:[%s3 + $0x1] sm:$0x1]
    %v38 = vmul.f32 %v30, %v32
    %v39 = vmul.f32 %v31, %v34
    %v40 = vadd.f32 %v38, %v39
    %v41 = vmax.f32 %v40, 0.0
    %v42 = vmul.f32 %v30, %v33
    %v43 = vmul.f32 %v31, %v35
    %v44 = vadd.f32 %v42, %v43
    %v45 = vmax.f32 %v44, 0.0
    %v46 = vmul.f32 %v41, %v36
    %v47 = vmul.f32 %v45, %v37
    %v48 = vadd.f32 %v46, %v47
    %49 = vst [vmem:[#allocation5] sm:$0x1] %v48
    // Predicated region
    $region22: #{tpu_custom_call.1} parent=1 // pred_check
      _
    $region23: #{tpu_custom_call.1} parent=1 // pred_check_branch
      %51 = sbr.rel (0) target = $region25
    $region24: #{tpu_custom_call.1} parent=1 // pred_region
      %s53 = ssub.s32 16, 16
      %54 = vsyncadd [#allocation4], %s53
      %s56 = sshll.u32 [#allocation5], 4
      %s57 = int_to_ptr.vmem [resolvable:$true] %s56
      %59 = dma.vmem_to_hbm [thread:$0]  %s57, 16, %s4, [#allocation4]
    $region25: #{tpu_custom_call.1} parent=1 // pred_fallthru
      _
    // Predicated region
    $region26: #{tpu_custom_call.1} parent=1 // pred_check
      _
    $region27: #{tpu_custom_call.1} parent=1 // pred_check_branch
      %61 = sbr.rel (0) target = $region29
    $region28: #{tpu_custom_call.1} parent=1 // pred_region
      %62 = dma.done [#allocation4], 16
    $region29: #{tpu_custom_call.1} parent=1 // pred_fallthru
      _
    %63 = vsyncpa [#allocation3], 1
    %64 = vsyncpa [#allocation4], 1

</llo_original>
